<compile_context>
chip_gen: v6e
topology: v6e:2x2x1
jax: 0.10.0
libtpu: 0.0.40
codegen_flags: <defaults>
</compile_context>

<pallas_src>
import functools
import math

import jax
import jax.numpy as jnp
from jax import lax
from jax.experimental import pallas as pl
from jax.experimental.pallas import tpu as pltpu


def cdconv_kernel(x_ref, w_ref, o_ref, *, tap_offsets, n_pix):
    # x_ref : (Cin, Lpad)       bf16  zero-padded, flattened image (1 batch elt)
    # w_ref : (9, Cout_t, Cin)  bf16  folded weights, tap-major (ky, kx)
    # o_ref : (Cout_t, n_pix)         output in padded-width pixel layout
    acc = None
    # Python unroll -> every tap window is a STATIC contiguous lane slice.
    for t, off in enumerate(tap_offsets):
        rhs = x_ref[:, pl.ds(off, n_pix)]                    # (Cin, n_pix) bf16
        part = jnp.dot(w_ref[t], rhs, preferred_element_type=jnp.float32)
        acc = part if acc is None else acc + part
    o_ref[...] = acc.astype(o_ref.dtype)


def _round_up(x, m):
    return (x + m - 1) // m * m


def _pick_cout_tile(cout):
    # Full Cout when small; otherwise the largest multiple-of-8 divisor <= 256.
    if cout <= 256:
        return cout
    for t in range(256, 7, -8):
        if cout % t == 0:
            return t
    return cout


def cdconv2d(x_nchw, weight_oihw, bias=None, *, stride=1, dilation=1, groups=1):
    """CDConv2d forward. x: (N, Cin, H, W) f32, weight: (Cout, Cin, 3, 3) f32."""
    # TODO(synk): stride > 1 and groups > 1 have no kernel path yet.
    assert stride == 1, "stride != 1 is not supported"
    assert groups == 1, "groups != 1 is not supported"
    assert weight_oihw.shape[2:] == (3, 3), "kernel size for cd_conv must be 3x3"
    assert dilation in (1, 2), "dilation for cd_conv should be 1 or 2"

    p = dilation
    N, Cin, H, W = x_nchw.shape
    Cout = weight_oihw.shape[0]
    assert weight_oihw.shape[1] == Cin

    Wpad = W + 2 * p                       # padded width (extra cols are junk)
    Hp = H + 2 * p
    n_pix = _round_up(H * Wpad, 128)       # lane-dense output pixels per image
    max_off = 2 * p * Wpad + 2 * p         # largest tap offset (ky=kx=2)
    Lpad = _round_up(n_pix + max_off, 128)  # flat input length incl. zero tail

    # Fold the central-difference term into the centre tap (exact because
    # padding == dilation, stride == 1), then lay out tap-major (9, Cout, Cin).
    w_eff = weight_oihw.at[:, :, 1, 1].add(-weight_oihw.sum(axis=(2, 3)))
    w_taps = jnp.transpose(w_eff, (2, 3, 0, 1)).reshape(9, Cout, Cin)
    w_taps = w_taps.astype(jnp.bfloat16)

    # Pad + flatten + bf16-cast once, in HBM, outside the kernel.
    xp = jnp.pad(x_nchw.astype(jnp.bfloat16), ((0, 0), (0, 0), (p, p), (p, p)))
    xflat = xp.reshape(N, Cin, Hp * Wpad)
    xflat = jnp.pad(xflat, ((0, 0), (0, 0), (0, Lpad - Hp * Wpad)))

    tap_offsets = tuple((ky * dilation) * Wpad + kx * dilation
                        for ky in range(3) for kx in range(3))

    t_co = _pick_cout_tile(Cout)
    num_co = Cout // t_co

    # VMEM budget using lane/sublane-rounded physical shapes (bf16 packs 16
    # rows / vreg, f32 packs 8), double-buffered in/out blocks + live temps.
    in_b = 2 * _round_up(Cin, 16) * _round_up(Lpad, 128) * 2
    w_b = 2 * 9 * _round_up(t_co, 16) * _round_up(Cin, 128) * 2
    out_b = 2 * _round_up(t_co, 8) * n_pix * 4
    tmp_b = (_round_up(t_co, 8) * n_pix * 4
             + 2 * _round_up(Cin, 16) * n_pix * 2)
    need = in_b + w_b + out_b + tmp_b
    try:
        cap = int(pltpu.get_tpu_info().vmem_capacity_bytes)
    except Exception:
        cap = 64 * 2 ** 20
    vmem_limit = int(min(max(2 * need, 32 * 2 ** 20), int(0.875 * cap)))

    out_flat = pl.pallas_call(
        functools.partial(cdconv_kernel, tap_offsets=tap_offsets, n_pix=n_pix),
        out_shape=jax.ShapeDtypeStruct((N, Cout, n_pix), x_nchw.dtype),
        grid=(N, num_co),
        in_specs=[
            # Whole padded/flattened image per batch element; the block index
            # only changes with n, so it is DMA'd once per batch element.
            pl.BlockSpec((None, Cin, Lpad), lambda n, co: (n, 0, 0)),
            pl.BlockSpec((9, t_co, Cin), lambda n, co: (0, co, 0)),
        ],
        out_specs=pl.BlockSpec((None, t_co, n_pix), lambda n, co: (n, co, 0)),
        compiler_params=pltpu.CompilerParams(
            dimension_semantics=("parallel", "parallel"),
            vmem_limit_bytes=vmem_limit),
    )(xflat, w_taps)

    # Drop the tail pixels and the 2p junk columns of each row (free reshape,
    # then a plain column slice).
    out = out_flat[:, :, :H * Wpad].reshape(N, Cout, H, Wpad)[:, :, :, :W]
    if bias is not None:
        # PyTorch applies bias only to y (not yc), so a post-hoc add is exact.
        out = out + bias.reshape(1, Cout, 1, 1).astype(out.dtype)
    return out


def reference_cdconv2d(x_nchw, weight_oihw, *, dilation=1):
    """Pure-f32 JAX reference mirroring the PyTorch forward."""
    pad = dilation
    dn = ("NCHW", "OIHW", "NCHW")
    wc = weight_oihw.sum(axis=(2, 3), keepdims=True)
    yc = lax.conv_general_dilated(x_nchw, wc, (1, 1), "VALID",
                                  dimension_numbers=dn,
                                  precision=lax.Precision.HIGHEST)
    y = lax.conv_general_dilated(x_nchw, weight_oihw, (1, 1),
                                 [(pad, pad), (pad, pad)],
                                 rhs_dilation=(dilation, dilation),
                                 dimension_numbers=dn,
                                 precision=lax.Precision.HIGHEST)
    return y - yc


def reference_cdconv2d_bf16(x_nchw, weight_oihw, *, dilation=1):
    """Reference applying the same bf16 operand quantisation as the kernel."""
    pad = dilation
    dn = ("NCHW", "OIHW", "NCHW")
    w_eff = weight_oihw.at[:, :, 1, 1].add(-weight_oihw.sum(axis=(2, 3)))
    w_bf = w_eff.astype(jnp.bfloat16).astype(jnp.float32)
    x_bf = x_nchw.astype(jnp.bfloat16).astype(jnp.float32)
    return lax.conv_general_dilated(x_bf, w_bf, (1, 1),
                                    [(pad, pad), (pad, pad)],
                                    rhs_dilation=(dilation, dilation),
                                    dimension_numbers=dn,
                                    precision=lax.Precision.HIGHEST)


if __name__ == "__main__":
    # Small shapes consistent with the module: N=2, Cin=4, Cout=8, H=W=16.
    N, Cin, Cout, H, W = 2, 4, 8, 16, 16

    key = jax.random.PRNGKey(0)
    kx_, kw_ = jax.random.split(key)
    x = jax.random.normal(kx_, (N, Cin, H, W), dtype=jnp.float32)

    # kaiming_uniform_(a=sqrt(5)) equivalent: U(-1/sqrt(fan_in), 1/sqrt(fan_in))
    fan_in = Cin * 3 * 3
    bound = 1.0 / math.sqrt(fan_in)
    weight = jax.random.uniform(kw_, (Cout, Cin, 3, 3), dtype=jnp.float32,
                                minval=-bound, maxval=bound)

    for dilation in (1, 2):
        out = cdconv2d(x, weight, dilation=dilation)
        out = jax.block_until_ready(out)
        assert out.shape == (N, Cout, H, W), out.shape

        # Tight check vs a reference using the same bf16 operand quantisation.
        ref_bf = reference_cdconv2d_bf16(x, weight, dilation=dilation)
        assert jnp.allclose(out, ref_bf, atol=2e-3, rtol=2e-3), \
            float(jnp.max(jnp.abs(out - ref_bf)))

        # Loose check vs the exact f32 PyTorch-semantics reference (difference
        # comes only from bf16 operand rounding on the MXU).
        ref = reference_cdconv2d(x, weight, dilation=dilation)
        assert jnp.allclose(out, ref, atol=1e-1, rtol=1e-1), \
            float(jnp.max(jnp.abs(out - ref)))

    print("KERNEL_OK")
</pallas_src>

<mosaic_0001>
module attributes {stable_mosaic.version = 11 : i64} {
  func.func @cdconv_kernel(%arg0: i32, %arg1: i32, %arg2: memref<1x4x512xbf16, #tpu.memory_space<vmem>>, %arg3: memref<9x8x4xbf16, #tpu.memory_space<vmem>>, %arg4: memref<1x8x384xf32, #tpu.memory_space<vmem>>) attributes {dimension_semantics = [#tpu.dimension_semantics<parallel>, #tpu.dimension_semantics<parallel>], iteration_bounds = array<i64: 2, 1>, scalar_prefetch = 0 : i64, scratch_operands = 0 : i64, tpu.core_type = #tpu.core_type<tc>, window_params = [{transform_indices = @transform_0, window_bounds = array<i64: 1, 4, 512>}, {transform_indices = @transform_1, window_bounds = array<i64: 9, 8, 4>}, {transform_indices = @transform_2, window_bounds = array<i64: 1, 8, 384>}]} {
    %c0 = arith.constant 0 : index
    %c0_0 = arith.constant 0 : index
    %c0_1 = arith.constant 0 : index
    %0 = vector.load %arg2[%c0, %c0_0, %c0_1] : memref<1x4x512xbf16, #tpu.memory_space<vmem>>, vector<1x4x384xbf16>
    %1 = vector.shape_cast %0 : vector<1x4x384xbf16> to vector<4x384xbf16>
    %c0_2 = arith.constant 0 : index
    %c0_3 = arith.constant 0 : index
    %c0_4 = arith.constant 0 : index
    %2 = vector.load %arg3[%c0_2, %c0_3, %c0_4] : memref<9x8x4xbf16, #tpu.memory_space<vmem>>, vector<1x8x4xbf16>
    %3 = vector.shape_cast %2 : vector<1x8x4xbf16> to vector<8x4xbf16>
    %cst = arith.constant dense<0.000000e+00> : vector<8x384xf32>
    %4 = tpu.matmul %3, %1, %cst {dimension_numbers = #tpu.dot_dimension_numbers<[1], [0], [0], [1], [0, 0, 1, 1], [], []>} : vector<8x4xbf16>, vector<4x384xbf16>, vector<8x384xf32> -> vector<8x384xf32>
    %c0_5 = arith.constant 0 : index
    %c0_6 = arith.constant 0 : index
    %c1 = arith.constant 1 : index
    %5 = vector.load %arg2[%c0_5, %c0_6, %c1] : memref<1x4x512xbf16, #tpu.memory_space<vmem>>, vector<1x4x384xbf16>
    %6 = vector.shape_cast %5 : vector<1x4x384xbf16> to vector<4x384xbf16>
    %c1_7 = arith.constant 1 : index
    %c0_8 = arith.constant 0 : index
    %c0_9 = arith.constant 0 : index
    %7 = vector.load %arg3[%c1_7, %c0_8, %c0_9] : memref<9x8x4xbf16, #tpu.memory_space<vmem>>, vector<1x8x4xbf16>
    %8 = vector.shape_cast %7 : vector<1x8x4xbf16> to vector<8x4xbf16>
    %cst_10 = arith.constant dense<0.000000e+00> : vector<8x384xf32>
    %9 = tpu.matmul %8, %6, %cst_10 {dimension_numbers = #tpu.dot_dimension_numbers<[1], [0], [0], [1], [0, 0, 1, 1], [], []>} : vector<8x4xbf16>, vector<4x384xbf16>, vector<8x384xf32> -> vector<8x384xf32>
    %10 = arith.addf %4, %9 : vector<8x384xf32>
    %c0_11 = arith.constant 0 : index
    %c0_12 = arith.constant 0 : index
    %c2 = arith.constant 2 : index
    %11 = vector.load %arg2[%c0_11, %c0_12, %c2] : memref<1x4x512xbf16, #tpu.memory_space<vmem>>, vector<1x4x384xbf16>
    %12 = vector.shape_cast %11 : vector<1x4x384xbf16> to vector<4x384xbf16>
    %c2_13 = arith.constant 2 : index
    %c0_14 = arith.constant 0 : index
    %c0_15 = arith.constant 0 : index
    %13 = vector.load %arg3[%c2_13, %c0_14, %c0_15] : memref<9x8x4xbf16, #tpu.memory_space<vmem>>, vector<1x8x4xbf16>
    %14 = vector.shape_cast %13 : vector<1x8x4xbf16> to vector<8x4xbf16>
    %cst_16 = arith.constant dense<0.000000e+00> : vector<8x384xf32>
    %15 = tpu.matmul %14, %12, %cst_16 {dimension_numbers = #tpu.dot_dimension_numbers<[1], [0], [0], [1], [0, 0, 1, 1], [], []>} : vector<8x4xbf16>, vector<4x384xbf16>, vector<8x384xf32> -> vector<8x384xf32>
    %16 = arith.addf %10, %15 : vector<8x384xf32>
    %c0_17 = arith.constant 0 : index
    %c0_18 = arith.constant 0 : index
    %c18 = arith.constant 18 : index
    %17 = vector.load %arg2[%c0_17, %c0_18, %c18] : memref<1x4x512xbf16, #tpu.memory_space<vmem>>, vector<1x4x384xbf16>
    %18 = vector.shape_cast %17 : vector<1x4x384xbf16> to vector<4x384xbf16>
    %c3 = arith.constant 3 : index
    %c0_19 = arith.constant 0 : index
    %c0_20 = arith.constant 0 : index
    %19 = vector.load %arg3[%c3, %c0_19, %c0_20] : memref<9x8x4xbf16, #tpu.memory_space<vmem>>, vector<1x8x4xbf16>
    %20 = vector.shape_cast %19 : vector<1x8x4xbf16> to vector<8x4xbf16>
    %cst_21 = arith.constant dense<0.000000e+00> : vector<8x384xf32>
    %21 = tpu.matmul %20, %18, %cst_21 {dimension_numbers = #tpu.dot_dimension_numbers<[1], [0], [0], [1], [0, 0, 1, 1], [], []>} : vector<8x4xbf16>, vector<4x384xbf16>, vector<8x384xf32> -> vector<8x384xf32>
    %22 = arith.addf %16, %21 : vector<8x384xf32>
    %c0_22 = arith.constant 0 : index
    %c0_23 = arith.constant 0 : index
    %c19 = arith.constant 19 : index
    %23 = vector.load %arg2[%c0_22, %c0_23, %c19] : memref<1x4x512xbf16, #tpu.memory_space<vmem>>, vector<1x4x384xbf16>
    %24 = vector.shape_cast %23 : vector<1x4x384xbf16> to vector<4x384xbf16>
    %c4 = arith.constant 4 : index
    %c0_24 = arith.constant 0 : index
    %c0_25 = arith.constant 0 : index
    %25 = vector.load %arg3[%c4, %c0_24, %c0_25] : memref<9x8x4xbf16, #tpu.memory_space<vmem>>, vector<1x8x4xbf16>
    %26 = vector.shape_cast %25 : vector<1x8x4xbf16> to vector<8x4xbf16>
    %cst_26 = arith.constant dense<0.000000e+00> : vector<8x384xf32>
    %27 = tpu.matmul %26, %24, %cst_26 {dimension_numbers = #tpu.dot_dimension_numbers<[1], [0], [0], [1], [0, 0, 1, 1], [], []>} : vector<8x4xbf16>, vector<4x384xbf16>, vector<8x384xf32> -> vector<8x384xf32>
    %28 = arith.addf %22, %27 : vector<8x384xf32>
    %c0_27 = arith.constant 0 : index
    %c0_28 = arith.constant 0 : index
    %c20 = arith.constant 20 : index
    %29 = vector.load %arg2[%c0_27, %c0_28, %c20] : memref<1x4x512xbf16, #tpu.memory_space<vmem>>, vector<1x4x384xbf16>
    %30 = vector.shape_cast %29 : vector<1x4x384xbf16> to vector<4x384xbf16>
    %c5 = arith.constant 5 : index
    %c0_29 = arith.constant 0 : index
    %c0_30 = arith.constant 0 : index
    %31 = vector.load %arg3[%c5, %c0_29, %c0_30] : memref<9x8x4xbf16, #tpu.memory_space<vmem>>, vector<1x8x4xbf16>
    %32 = vector.shape_cast %31 : vector<1x8x4xbf16> to vector<8x4xbf16>
    %cst_31 = arith.constant dense<0.000000e+00> : vector<8x384xf32>
    %33 = tpu.matmul %32, %30, %cst_31 {dimension_numbers = #tpu.dot_dimension_numbers<[1], [0], [0], [1], [0, 0, 1, 1], [], []>} : vector<8x4xbf16>, vector<4x384xbf16>, vector<8x384xf32> -> vector<8x384xf32>
    %34 = arith.addf %28, %33 : vector<8x384xf32>
    %c0_32 = arith.constant 0 : index
    %c0_33 = arith.constant 0 : index
    %c36 = arith.constant 36 : index
    %35 = vector.load %arg2[%c0_32, %c0_33, %c36] : memref<1x4x512xbf16, #tpu.memory_space<vmem>>, vector<1x4x384xbf16>
    %36 = vector.shape_cast %35 : vector<1x4x384xbf16> to vector<4x384xbf16>
    %c6 = arith.constant 6 : index
    %c0_34 = arith.constant 0 : index
    %c0_35 = arith.constant 0 : index
    %37 = vector.load %arg3[%c6, %c0_34, %c0_35] : memref<9x8x4xbf16, #tpu.memory_space<vmem>>, vector<1x8x4xbf16>
    %38 = vector.shape_cast %37 : vector<1x8x4xbf16> to vector<8x4xbf16>
    %cst_36 = arith.constant dense<0.000000e+00> : vector<8x384xf32>
    %39 = tpu.matmul %38, %36, %cst_36 {dimension_numbers = #tpu.dot_dimension_numbers<[1], [0], [0], [1], [0, 0, 1, 1], [], []>} : vector<8x4xbf16>, vector<4x384xbf16>, vector<8x384xf32> -> vector<8x384xf32>
    %40 = arith.addf %34, %39 : vector<8x384xf32>
    %c0_37 = arith.constant 0 : index
    %c0_38 = arith.constant 0 : index
    %c37 = arith.constant 37 : index
    %41 = vector.load %arg2[%c0_37, %c0_38, %c37] : memref<1x4x512xbf16, #tpu.memory_space<vmem>>, vector<1x4x384xbf16>
    %42 = vector.shape_cast %41 : vector<1x4x384xbf16> to vector<4x384xbf16>
    %c7 = arith.constant 7 : index
    %c0_39 = arith.constant 0 : index
    %c0_40 = arith.constant 0 : index
    %43 = vector.load %arg3[%c7, %c0_39, %c0_40] : memref<9x8x4xbf16, #tpu.memory_space<vmem>>, vector<1x8x4xbf16>
    %44 = vector.shape_cast %43 : vector<1x8x4xbf16> to vector<8x4xbf16>
    %cst_41 = arith.constant dense<0.000000e+00> : vector<8x384xf32>
    %45 = tpu.matmul %44, %42, %cst_41 {dimension_numbers = #tpu.dot_dimension_numbers<[1], [0], [0], [1], [0, 0, 1, 1], [], []>} : vector<8x4xbf16>, vector<4x384xbf16>, vector<8x384xf32> -> vector<8x384xf32>
    %46 = arith.addf %40, %45 : vector<8x384xf32>
    %c0_42 = arith.constant 0 : index
    %c0_43 = arith.constant 0 : index
    %c38 = arith.constant 38 : index
    %47 = vector.load %arg2[%c0_42, %c0_43, %c38] : memref<1x4x512xbf16, #tpu.memory_space<vmem>>, vector<1x4x384xbf16>
    %48 = vector.shape_cast %47 : vector<1x4x384xbf16> to vector<4x384xbf16>
    %c8 = arith.constant 8 : index
    %c0_44 = arith.constant 0 : index
    %c0_45 = arith.constant 0 : index
    %49 = vector.load %arg3[%c8, %c0_44, %c0_45] : memref<9x8x4xbf16, #tpu.memory_space<vmem>>, vector<1x8x4xbf16>
    %50 = vector.shape_cast %49 : vector<1x8x4xbf16> to vector<8x4xbf16>
    %cst_46 = arith.constant dense<0.000000e+00> : vector<8x384xf32>
    %51 = tpu.matmul %50, %48, %cst_46 {dimension_numbers = #tpu.dot_dimension_numbers<[1], [0], [0], [1], [0, 0, 1, 1], [], []>} : vector<8x4xbf16>, vector<4x384xbf16>, vector<8x384xf32> -> vector<8x384xf32>
    %52 = arith.addf %46, %51 : vector<8x384xf32>
    %c0_47 = arith.constant 0 : index
    %c0_48 = arith.constant 0 : index
    %c0_49 = arith.constant 0 : index
    %53 = vector.load %arg4[%c0_47, %c0_48, %c0_49] : memref<1x8x384xf32, #tpu.memory_space<vmem>>, vector<1x8x384xf32>
    %54 = vector.shape_cast %53 : vector<1x8x384xf32> to vector<8x384xf32>
    %55 = vector.shape_cast %52 : vector<8x384xf32> to vector<1x8x384xf32>
    tpu.vector_store %arg4[%c0_47, %c0_48, %c0_49], %55 {strides = array<i32>} : memref<1x8x384xf32, #tpu.memory_space<vmem>>, vector<1x8x384xf32>,
    return
  }
  func.func @transform_0(%arg0: i32, %arg1: i32) -> (i32, i32, i32) {
    %c0_i32 = arith.constant 0 : i32
    %c0_i32_0 = arith.constant 0 : i32
    %c0_i32_1 = arith.constant 0 : i32
    return %arg0, %c0_i32, %c0_i32_0 : i32, i32, i32
  }
  func.func @transform_1(%arg0: i32, %arg1: i32) -> (i32, i32, i32) {
    %c0_i32 = arith.constant 0 : i32
    %c0_i32_0 = arith.constant 0 : i32
    %c0_i32_1 = arith.constant 0 : i32
    return %c0_i32, %arg1, %c0_i32_0 : i32, i32, i32
  }
  func.func @transform_2(%arg0: i32, %arg1: i32) -> (i32, i32, i32) {
    %c0_i32 = arith.constant 0 : i32
    %c0_i32_0 = arith.constant 0 : i32
    return %arg0, %arg1, %c0_i32 : i32, i32, i32
  }
}

</mosaic_0001>

<llo_original>
// kernel: tpu_custom_call.1
$region0: #{tpu_custom_call.1}
  #allocation0 [shape = 'u32[]', space=smem, size = 0x4, offset = 0x4, fixed_abs, tag = 'smem constant byte address 0x4 - core index']
  #allocation1 [shape = 'u32[144,128]{1,0:T(1,128)}', space=vmem, size = 0x12000, scoped, tag = 'internal scratch']
  %s0 = inlined_call_operand.vmem [shape: bf16[2,4,512], index: 0, kind: input, shape index: {}]
  %s1 = inlined_call_operand.vmem [shape: bf16[9,8,4], index: 1, kind: input, shape index: {}]
  %s2 = inlined_call_operand.hbm [shape: f32[2,8,384], index: 2, kind: output, shape index: {}]
  %s3 = sld [smem:[#allocation0]]
  $region41: #{tpu_custom_call.1} parent=0
    _
  %s5 = ssub.s32 1, %s3
  %s6 = scalar_select 0, %s5, %s3
  $region1: #{tpu_custom_call.1} parent=0
    #allocation2 [shape = 'u8[24576]{0}', space=vmem, size = 0x6000, scoped, tag = 'output window, operand 0']
    #allocation3 [shape = 's32[2]{0}', space=sflag, size = 0x8, scoped, tag = 'scoped memory for tpu_custom_call.1']
    %7 = vsyncpa [#allocation3], 0
    %s8 = scalar_lea.sflag [#allocation3], 1
    %9 = vsyncpa %s8, 0
    loop: start=0, step=1, limit=4
    $region2: #{tpu_custom_call.1} parent=1 // loop_pre_header
      _
    $region3: #{tpu_custom_call.1} parent=1 // loop_header
      %s11 = sphi 0, %s15
      %p12 = scmp.ge.s32.totalorder %s11, 4
      %s18 = sphi 0, %s30
      %s19 = sphi 0, %s26
      %s20 = sphi 0, %s18
      %s21 = sphi 0, %s19
      %s22 = sphi 0, %s20
      %s23 = sphi 0, %s21
      %s33 = sphi 0, %s35
      %s36 = sphi 0, %s33
      %s37 = sphi 0, %s36
      %s53 = sphi 0, %s37
      %s59 = sphi 0, %s61
      %s62 = sphi 0, %s59
      %s63 = sphi 0, %s62
      %s79 = sphi 0, %s63
      %s87 = sphi 0, %s89
      %s90 = sphi 0, %s87
      %s91 = sphi 0, %s90
      %s107 = sphi 0, %s91
    $region4: #{tpu_custom_call.1} parent=1 // loop_header_branch
      %14 = sbr.rel (%p12) target = $region8
    $region5: #{tpu_custom_call.1} parent=1 // loop_body
      %s16 = ssub.s32 %s11, 1
      %s17 = ssub.s32 %s11, 2
      %s24 = sadd.s32 1, %s19
      %p25 = scmp.ge.s32.totalorder %s24, 1
      %s26 = scalar_select %p25, 0, %s24
      %s27 = sadd.s32 1, %s18
      %s28 = scalar_select %p25, %s27, %s18
      %p29 = scmp.ge.s32.totalorder %s28, 2
      %s30 = scalar_select %p29, 0, %s28
      %s31 = ssub.s32 %s18, %s30
      %p32 = scmp.eq.s32.totalorder %s31, 0
      %s34 = sadd.s32 %s33, 1
      %s35 = scalar_select %p32, %s33, %s34
      %p38 = pneg %p32
      %p39 = scmp.eq.s32.totalorder %s11, 1
      %p40 = por %p38, %p39
      %p41 = scmp.ne.s32.totalorder %s33, %s36
      %p42 = scmp.eq.s32.totalorder %s11, 0
      %p43 = por %p41, %p42
      %p44 = scmp.ne.s32.totalorder %s33, %s36
      %p45 = scmp.eq.s32.totalorder %s16, 1
      %p46 = por %p44, %p45
      %p47 = scmp.ne.s32.totalorder %s36, %s37
      %p48 = scmp.eq.s32.totalorder %s16, 0
      %p49 = por %p47, %p48
      %p50 = scmp.ne.s32.totalorder %s36, %s37
      %p51 = scmp.eq.s32.totalorder %s17, 1
      %p52 = por %p50, %p51
      %p54 = scmp.ne.s32.totalorder %s37, %s53
      %p55 = scmp.eq.s32.totalorder %s17, 0
      %p56 = por %p54, %p55
      %s57 = ssub.s32 %s19, %s26
      %p58 = scmp.eq.s32.totalorder %s57, 0
      %s60 = sadd.s32 %s59, 1
      %s61 = scalar_select %p58, %s59, %s60
      %p64 = pneg %p58
      %p65 = scmp.eq.s32.totalorder %s11, 1
      %p66 = por %p64, %p65
      %p67 = scmp.ne.s32.totalorder %s59, %s62
      %p68 = scmp.eq.s32.totalorder %s11, 0
      %p69 = por %p67, %p68
      %p70 = scmp.ne.s32.totalorder %s59, %s62
      %p71 = scmp.eq.s32.totalorder %s16, 1
      %p72 = por %p70, %p71
      %p73 = scmp.ne.s32.totalorder %s62, %s63
      %p74 = scmp.eq.s32.totalorder %s16, 0
      %p75 = por %p73, %p74
      %p76 = scmp.ne.s32.totalorder %s62, %s63
      %p77 = scmp.eq.s32.totalorder %s17, 1
      %p78 = por %p76, %p77
      %p80 = scmp.ne.s32.totalorder %s63, %s79
      %p81 = scmp.eq.s32.totalorder %s17, 0
      %p82 = por %p80, %p81
      %s83 = ssub.s32 %s18, %s30
      %s84 = ssub.s32 %s19, %s26
      %s85 = sor.u32 %s83, %s84
      %p86 = scmp.eq.s32.totalorder %s85, 0
      %s88 = sadd.s32 %s87, 1
      %s89 = scalar_select %p86, %s87, %s88
      %p92 = pneg %p86
      %p93 = scmp.eq.s32.totalorder %s11, 1
      %p94 = por %p92, %p93
      %p95 = scmp.ne.s32.totalorder %s87, %s90
      %p96 = scmp.eq.s32.totalorder %s11, 0
      %p97 = por %p95, %p96
      %p98 = scmp.ne.s32.totalorder %s87, %s90
      %p99 = scmp.eq.s32.totalorder %s16, 1
      %p100 = por %p98, %p99
      %p101 = scmp.ne.s32.totalorder %s90, %s91
      %p102 = scmp.eq.s32.totalorder %s16, 0
      %p103 = por %p101, %p102
      %p104 = scmp.ne.s32.totalorder %s90, %s91
      %p105 = scmp.eq.s32.totalorder %s17, 1
      %p106 = por %p104, %p105
      %p108 = scmp.ne.s32.totalorder %s91, %s107
      %p109 = scmp.eq.s32.totalorder %s17, 0
      %p110 = por %p108, %p109
      %p111 = scmp.le.s32.totalorder 1, %s11
      %p112 = scmp.lt.s32.totalorder %s11, 3
      %p113 = pnand %p111, %p112
      %p114 = pneg %p113
      // Predicated region
      $region9: #{tpu_custom_call.1} parent=5 // pred_check
        _
      $region10: #{tpu_custom_call.1} parent=5 // pred_check_branch
        %116 = sbr.rel (%p113) target = $region12
      $region11: #{tpu_custom_call.1} parent=5 // pred_region
        %s117 = ssub.s32 %s11, 1
        // Predicated region
        $region13: #{tpu_custom_call.1} parent=11 // pred_check
          %p118 = pneg %p75
        $region14: #{tpu_custom_call.1} parent=11 // pred_check_branch
          %120 = sbr.rel (%p118) target = $region16
        $region15: #{tpu_custom_call.1} parent=11 // pred_region
          %p121 = scmp.lt.s32.totalorder %s21, 0
          %s122 = scalar_select %p121, %s21, 0
          %s123 = smul.addr %s122, 4
          %s124 = scalar_lea.vmem %s1, %s123
        $region16: #{tpu_custom_call.1} parent=11 // pred_fallthru
          _
      $region12: #{tpu_custom_call.1} parent=5 // pred_fallthru
        _
      %p125 = scmp.lt.s32.totalorder %s11, 2
      // Predicated region
      $region17: #{tpu_custom_call.1} parent=5 // pred_check
        %p126 = pneg %p125
      $region18: #{tpu_custom_call.1} parent=5 // pred_check_branch
        %128 = sbr.rel (%p126) target = $region20
      $region19: #{tpu_custom_call.1} parent=5 // pred_region
        // Predicated region
        $region21: #{tpu_custom_call.1} parent=19 // pred_check
          %p129 = pneg %p43
        $region22: #{tpu_custom_call.1} parent=19 // pred_check_branch
          %131 = sbr.rel (%p129) target = $region24
        $region23: #{tpu_custom_call.1} parent=19 // pred_region
          %p132 = scmp.lt.s32.totalorder %s18, 1
          %s133 = scalar_select %p132, %s18, 1
          %s134 = smul.addr %s133, 4
          %s135 = smul.addr %s134, 2
          %s136 = scalar_lea.vmem %s0, %s135
        $region24: #{tpu_custom_call.1} parent=19 // pred_fallthru
          _
      $region20: #{tpu_custom_call.1} parent=5 // pred_fallthru
        _
      %p137 = scmp.le.s32.totalorder 1, %s11
      %p138 = scmp.lt.s32.totalorder %s11, 3
      %p139 = pnand %p137, %p138
      %p140 = pneg %p139
      // Predicated region
      $region25: #{tpu_custom_call.1} parent=5 // pred_check
        _
      $region26: #{tpu_custom_call.1} parent=5 // pred_check_branch
        %142 = sbr.rel (%p139) target = $region28
      $region27: #{tpu_custom_call.1} parent=5 // pred_region
        %s143 = ssub.s32 %s11, 1
        %p144 = scmp.lt.s32.totalorder %s20, 1
        %s145 = scalar_select %p144, %s20, 1
        %s146 = smul.addr %s145, 4
        %s147 = smul.addr %s146, 2
        %s148 = scalar_lea.vmem %s0, %s147
        %p149 = pneg %p49
        %p150 = pneg %p46
        %p151 = scmp.lt.s32.totalorder %s21, 0
        %s152 = scalar_select %p151, %s21, 0
        %s153 = smul.addr %s152, 4
        %s154 = scalar_lea.vmem %s1, %s153
        %p155 = pneg %p75
        %p156 = pneg %p72
        %p157 = pneg %p103
        %p158 = pneg %p100
        %s159 = sand.u32 %s90, 1
        %s160 = scalar_lea.sflag [#allocation3], %s159
        %s161 = sand.u32 %s90, 1
        %s162 = smul.addr %s161, 24
        %s163 = scalar_lea.vmem [#allocation2], %s162
        %p164 = scmp.lt.s32.totalorder %s20, 1
        %s165 = scalar_select %p164, %s20, 1
        %s166 = smul.addr %s165, 4
        %s167 = smul.addr %s166, 2
        %s168 = scalar_lea.vmem %s0, %s167
        %p169 = scmp.lt.s32.totalorder %s21, 0
        %s170 = scalar_select %p169, %s21, 0
        %s171 = smul.addr %s170, 4
        %s172 = scalar_lea.vmem %s1, %s171
        %v174 = vld [vmem:[%s168] sm:$0x3f]
        %v175 = vld [vmem:[%s172] sm:$0xf]
        %v176 = vld [vmem:[%s168] sm:$0xff]
        %s177 = scalar_lea.vmem %s172, 4
        %v178 = vld [vmem:[%s177] sm:$0xf]
        %v180 = vcombine.high %v176, %v176
        %v182 = vunpack.c.l.s4 1983009808
        %v183 = vunpack.c.0.s8 %v182
        %v184 = vlaneseq
        %v185 = vshrl.u32 %v184, 7
        %v186 = vsub.s32 %v183, %v185
        %v187 = vrot.slane %v176, %v186
        %v189 = vunpack.c.l.s4 1983009808
        %v190 = vunpack.c.0.s8 %v189
        %v191 = vlaneseq
        %v192 = vshrl.u32 %v191, 7
        %v193 = vsub.s32 %v190, %v192
        %v194 = vrot.slane %v180, %v193
        %v195 = vcombine.high %v187, %v187
        %v196 = vcombine.high %v194, %v194
        %197 = vrot.lane.b32.xlu0 %v187, 127
        %v198 = vpop.permute.xlu0 %197
        %199 = vrot.lane.b32.xlu0 %v195, 127
        %v200 = vpop.permute.xlu0 %199
        %201 = vrot.lane.b32.xlu0 %v194, 127
        %v202 = vpop.permute.xlu0 %201
        %203 = vrot.lane.b32.xlu0 %v196, 127
        %v204 = vpop.permute.xlu0 %203
        %vm205 = vcmask 1039360
        %v206 = vsel %vm205, %v198, %v200
        %v207 = vsel %vm205, %v200, %v202
        %v208 = vsel %vm205, %v202, %v204
        %vm209 = vcmask 31744
        %v211 = vsel %vm209, %v178, 0
        %vm213 = vcmask 1041408
        %v215 = vsel %vm213, %v206, 0
        %v218 = vsel %vm213, %v207, 0
        %v221 = vsel %vm213, %v208, 0
        %223 = vmatprep.subr.bf16.mxu0 0
        %224 = vmatpush1.bf16.msra.mxu0 0
        %225 = vmatprep.subr.bf16.mxu0 0
        %226 = vmatpush1.bf16.msra.mxu0 0
        %227 = vmatprep.subr.bf16.mxu0 0
        %228 = vmatpush1.bf16.msra.mxu0 0
        %229 = vmatprep.subr.bf16.mxu0 0
        %230 = vmatpush1.bf16.msra.mxu0 0
        %231 = vmatprep.subr.bf16.mxu0 0
        %232 = vmatpush1.bf16.msra.mxu0 0
        %233 = vmatprep.subr.bf16.mxu0 0
        %234 = vmatpush1.bf16.msra.mxu0 0
        %235 = vmatprep.subr.bf16.mxu0 0
        %236 = vmatpush1.bf16.msra.mxu0 0
        %237 = vmatprep.subr.bf16.mxu0 %v218
        %238 = vmatpush1.bf16.msra.mxu0 %v215
        %239 = vmatprep.subr.bf16.mxu0 0
        %240 = vmatpush2.bf16.msra.mxu0 0
        %241 = vmatprep.subr.bf16.mxu0 0
        %242 = vmatpush2.bf16.msra.mxu0 0
        %243 = vmatprep.subr.bf16.mxu0 0
        %244 = vmatpush2.bf16.msra.mxu0 0
        %245 = vmatprep.subr.bf16.mxu0 0
        %246 = vmatpush2.bf16.msra.mxu0 0
        %247 = vmatprep.subr.bf16.mxu0 0
        %248 = vmatpush2.bf16.msra.mxu0 0
        %249 = vmatprep.subr.bf16.mxu0 0
        %250 = vmatpush2.bf16.msra.mxu0 0
        %251 = vmatprep.subr.bf16.mxu0 0
        %252 = vmatpush2.bf16.msra.mxu0 0
        %253 = vmatprep.subr.bf16.mxu0 0
        %254 = vmatpush2.bf16.msra.mxu0 0
        %255 = vmatprep.mubr.bf16.mxu0 0
        %256 = vmatmul.mubr.bf16.gmra.mxu0 %v211
        %v257 = vpop.f32.mrf.mxu0
        %v258 = vadd.f32 0.0, %v257
        %v259 = vpop.f32.mrf.mxu0
        %v260 = vadd.f32 0.0, %v259
        %v261 = vpop.f32.mrf.mxu0
        %v262 = vpop.f32.mrf.mxu0
        %263 = vdwg.mxu0
        %264 = vmatprep.subr.bf16.mxu0 0
        %265 = vmatpush1.bf16.msra.mxu0 0
        %266 = vmatprep.subr.bf16.mxu0 0
        %267 = vmatpush1.bf16.msra.mxu0 0
        %268 = vmatprep.subr.bf16.mxu0 0
        %269 = vmatpush1.bf16.msra.mxu0 0
        %270 = vmatprep.subr.bf16.mxu0 0
        %271 = vmatpush1.bf16.msra.mxu0 0
        %272 = vmatprep.subr.bf16.mxu0 0
        %273 = vmatpush1.bf16.msra.mxu0 0
        %274 = vmatprep.subr.bf16.mxu0 0
        %275 = vmatpush1.bf16.msra.mxu0 0
        %276 = vmatprep.subr.bf16.mxu0 0
        %277 = vmatpush1.bf16.msra.mxu0 0
        %278 = vmatprep.subr.bf16.mxu0 0
        %279 = vmatpush1.bf16.msra.mxu0 %v221
        %280 = vmatprep.subr.bf16.mxu0 0
        %281 = vmatpush2.bf16.msra.mxu0 0
        %282 = vmatprep.subr.bf16.mxu0 0
        %283 = vmatpush2.bf16.msra.mxu0 0
        %284 = vmatprep.subr.bf16.mxu0 0
        %285 = vmatpush2.bf16.msra.mxu0 0
        %286 = vmatprep.subr.bf16.mxu0 0
        %287 = vmatpush2.bf16.msra.mxu0 0
        %288 = vmatprep.subr.bf16.mxu0 0
        %289 = vmatpush2.bf16.msra.mxu0 0
        %290 = vmatprep.subr.bf16.mxu0 0
        %291 = vmatpush2.bf16.msra.mxu0 0
        %292 = vmatprep.subr.bf16.mxu0 0
        %293 = vmatpush2.bf16.msra.mxu0 0
        %294 = vmatprep.subr.bf16.mxu0 0
        %295 = vmatpush2.bf16.msra.mxu0 0
        %296 = vmatprep.mubr.bf16.mxu0 0
        %297 = vmatmul.mubr.bf16.gmra.mxu0 %v211
        %v298 = vpop.f32.mrf.mxu0
        %v299 = vadd.f32 0.0, %v298
        %v300 = vpop.f32.mrf.mxu0
        %v301 = vpop.f32.mrf.mxu0
        %v302 = vpop.f32.mrf.mxu0
        %303 = vdwg.mxu0
        %v305 = vcombine.high %v174, %v174
        %v307 = vunpack.c.l.s4 1983009808
        %v308 = vunpack.c.0.s8 %v307
        %v309 = vlaneseq
        %v310 = vshrl.u32 %v309, 7
        %v311 = vsub.s32 %v308, %v310
        %v312 = vrot.slane %v174, %v311
        %v314 = vunpack.c.l.s4 1983009808
        %v315 = vunpack.c.0.s8 %v314
        %v316 = vlaneseq
        %v317 = vshrl.u32 %v316, 7
        %v318 = vsub.s32 %v315, %v317
        %v319 = vrot.slane %v305, %v318
        %v320 = vcombine.high %v312, %v312
        %v322 = vsel %vm209, %v175, 0
        %v325 = vsel %vm213, %v312, 0
        %v328 = vsel %vm213, %v320, 0
        %v331 = vsel %vm213, %v319, 0
        %333 = vmatprep.subr.bf16.mxu0 0
        %334 = vmatpush1.bf16.msra.mxu0 0
        %335 = vmatprep.subr.bf16.mxu0 0
        %336 = vmatpush1.bf16.msra.mxu0 0
        %337 = vmatprep.subr.bf16.mxu0 0
        %338 = vmatpush1.bf16.msra.mxu0 0
        %339 = vmatprep.subr.bf16.mxu0 0
        %340 = vmatpush1.bf16.msra.mxu0 0
        %341 = vmatprep.subr.bf16.mxu0 0
        %342 = vmatpush1.bf16.msra.mxu0 0
        %343 = vmatprep.subr.bf16.mxu0 0
        %344 = vmatpush1.bf16.msra.mxu0 0
        %345 = vmatprep.subr.bf16.mxu0 0
        %346 = vmatpush1.bf16.msra.mxu0 0
        %347 = vmatprep.subr.bf16.mxu0 %v328
        %348 = vmatpush1.bf16.msra.mxu0 %v325
        %349 = vmatprep.subr.bf16.mxu0 0
        %350 = vmatpush2.bf16.msra.mxu0 0
        %351 = vmatprep.subr.bf16.mxu0 0
        %352 = vmatpush2.bf16.msra.mxu0 0
        %353 = vmatprep.subr.bf16.mxu0 0
        %354 = vmatpush2.bf16.msra.mxu0 0
        %355 = vmatprep.subr.bf16.mxu0 0
        %356 = vmatpush2.bf16.msra.mxu0 0
        %357 = vmatprep.subr.bf16.mxu0 0
        %358 = vmatpush2.bf16.msra.mxu0 0
        %359 = vmatprep.subr.bf16.mxu0 0
        %360 = vmatpush2.bf16.msra.mxu0 0
        %361 = vmatprep.subr.bf16.mxu0 0
        %362 = vmatpush2.bf16.msra.mxu0 0
        %363 = vmatprep.subr.bf16.mxu0 0
        %364 = vmatpush2.bf16.msra.mxu0 0
        %365 = vmatprep.mubr.bf16.mxu0 0
        %366 = vmatmul.mubr.bf16.gmra.mxu0 %v322
        %v367 = vpop.f32.mrf.mxu0
        %v368 = vadd.f32 %v258, %v367
        %v369 = vpop.f32.mrf.mxu0
        %v370 = vadd.f32 %v260, %v369
        %v371 = vpop.f32.mrf.mxu0
        %v372 = vpop.f32.mrf.mxu0
        %373 = vdwg.mxu0
        %374 = vmatprep.subr.bf16.mxu0 0
        %375 = vmatpush1.bf16.msra.mxu0 0
        %376 = vmatprep.subr.bf16.mxu0 0
        %377 = vmatpush1.bf16.msra.mxu0 0
        %378 = vmatprep.subr.bf16.mxu0 0
        %379 = vmatpush1.bf16.msra.mxu0 0
        %380 = vmatprep.subr.bf16.mxu0 0
        %381 = vmatpush1.bf16.msra.mxu0 0
        %382 = vmatprep.subr.bf16.mxu0 0
        %383 = vmatpush1.bf16.msra.mxu0 0
        %384 = vmatprep.subr.bf16.mxu0 0
        %385 = vmatpush1.bf16.msra.mxu0 0
        %386 = vmatprep.subr.bf16.mxu0 0
        %387 = vmatpush1.bf16.msra.mxu0 0
        %388 = vmatprep.subr.bf16.mxu0 0
        %389 = vmatpush1.bf16.msra.mxu0 %v331
        %390 = vmatprep.subr.bf16.mxu0 0
        %391 = vmatpush2.bf16.msra.mxu0 0
        %392 = vmatprep.subr.bf16.mxu0 0
        %393 = vmatpush2.bf16.msra.mxu0 0
        %394 = vmatprep.subr.bf16.mxu0 0
        %395 = vmatpush2.bf16.msra.mxu0 0
        %396 = vmatprep.subr.bf16.mxu0 0
        %397 = vmatpush2.bf16.msra.mxu0 0
        %398 = vmatprep.subr.bf16.mxu0 0
        %399 = vmatpush2.bf16.msra.mxu0 0
        %400 = vmatprep.subr.bf16.mxu0 0
        %401 = vmatpush2.bf16.msra.mxu0 0
        %402 = vmatprep.subr.bf16.mxu0 0
        %403 = vmatpush2.bf16.msra.mxu0 0
        %404 = vmatprep.subr.bf16.mxu0 0
        %405 = vmatpush2.bf16.msra.mxu0 0
        %406 = vmatprep.mubr.bf16.mxu0 0
        %407 = vmatmul.mubr.bf16.gmra.mxu0 %v322
        %v408 = vpop.f32.mrf.mxu0
        %v409 = vadd.f32 %v299, %v408
        %v410 = vpop.f32.mrf.mxu0
        %v411 = vpop.f32.mrf.mxu0
        %v412 = vpop.f32.mrf.mxu0
        %413 = vdwg.mxu0
        %v414 = vld [vmem:[%s168] sm:$0xff]
        %s415 = scalar_lea.vmem %s172, 8
        %v416 = vld [vmem:[%s415] sm:$0xf]
        %v418 = vcombine.high %v414, %v414
        %v420 = vunpack.c.l.s4 1983009808
        %v421 = vunpack.c.0.s8 %v420
        %v422 = vlaneseq
        %v423 = vshrl.u32 %v422, 7
        %v424 = vsub.s32 %v421, %v423
        %v425 = vrot.slane %v414, %v424
        %v427 = vunpack.c.l.s4 1983009808
        %v428 = vunpack.c.0.s8 %v427
        %v429 = vlaneseq
        %v430 = vshrl.u32 %v429, 7
        %v431 = vsub.s32 %v428, %v430
        %v432 = vrot.slane %v418, %v431
        %v433 = vcombine.high %v425, %v425
        %v434 = vcombine.high %v432, %v432
        %435 = vrot.lane.b32.xlu0 %v425, 126
        %v436 = vpop.permute.xlu0 %435
        %437 = vrot.lane.b32.xlu0 %v433, 126
        %v438 = vpop.permute.xlu0 %437
        %439 = vrot.lane.b32.xlu0 %v432, 126
        %v440 = vpop.permute.xlu0 %439
        %441 = vrot.lane.b32.xlu0 %v434, 126
        %v442 = vpop.permute.xlu0 %441
        %vm443 = vcmask 1031168
        %v444 = vsel %vm443, %v436, %v438
        %v445 = vsel %vm443, %v438, %v440
        %v446 = vsel %vm443, %v440, %v442
        %v448 = vsel %vm209, %v416, 0
        %v451 = vsel %vm213, %v444, 0
        %v454 = vsel %vm213, %v445, 0
        %v457 = vsel %vm213, %v446, 0
        %459 = vmatprep.subr.bf16.mxu0 0
        %460 = vmatpush1.bf16.msra.mxu0 0
        %461 = vmatprep.subr.bf16.mxu0 0
        %462 = vmatpush1.bf16.msra.mxu0 0
        %463 = vmatprep.subr.bf16.mxu0 0
        %464 = vmatpush1.bf16.msra.mxu0 0
        %465 = vmatprep.subr.bf16.mxu0 0
        %466 = vmatpush1.bf16.msra.mxu0 0
        %467 = vmatprep.subr.bf16.mxu0 0
        %468 = vmatpush1.bf16.msra.mxu0 0
        %469 = vmatprep.subr.bf16.mxu0 0
        %470 = vmatpush1.bf16.msra.mxu0 0
        %471 = vmatprep.subr.bf16.mxu0 0
        %472 = vmatpush1.bf16.msra.mxu0 0
        %473 = vmatprep.subr.bf16.mxu0 %v454
        %474 = vmatpush1.bf16.msra.mxu0 %v451
        %475 = vmatprep.subr.bf16.mxu0 0
        %476 = vmatpush2.bf16.msra.mxu0 0
        %477 = vmatprep.subr.bf16.mxu0 0
        %478 = vmatpush2.bf16.msra.mxu0 0
        %479 = vmatprep.subr.bf16.mxu0 0
        %480 = vmatpush2.bf16.msra.mxu0 0
        %481 = vmatprep.subr.bf16.mxu0 0
        %482 = vmatpush2.bf16.msra.mxu0 0
        %483 = vmatprep.subr.bf16.mxu0 0
        %484 = vmatpush2.bf16.msra.mxu0 0
        %485 = vmatprep.subr.bf16.mxu0 0
        %486 = vmatpush2.bf16.msra.mxu0 0
        %487 = vmatprep.subr.bf16.mxu0 0
        %488 = vmatpush2.bf16.msra.mxu0 0
        %489 = vmatprep.subr.bf16.mxu0 0
        %490 = vmatpush2.bf16.msra.mxu0 0
        %491 = vmatprep.mubr.bf16.mxu0 0
        %492 = vmatmul.mubr.bf16.gmra.mxu0 %v448
        %v493 = vpop.f32.mrf.mxu0
        %v494 = vadd.f32 0.0, %v493
        %v495 = vpop.f32.mrf.mxu0
        %v496 = vadd.f32 0.0, %v495
        %v497 = vpop.f32.mrf.mxu0
        %v498 = vpop.f32.mrf.mxu0
        %499 = vdwg.mxu0
        %500 = vmatprep.subr.bf16.mxu0 0
        %501 = vmatpush1.bf16.msra.mxu0 0
        %502 = vmatprep.subr.bf16.mxu0 0
        %503 = vmatpush1.bf16.msra.mxu0 0
        %504 = vmatprep.subr.bf16.mxu0 0
        %505 = vmatpush1.bf16.msra.mxu0 0
        %506 = vmatprep.subr.bf16.mxu0 0
        %507 = vmatpush1.bf16.msra.mxu0 0
        %508 = vmatprep.subr.bf16.mxu0 0
        %509 = vmatpush1.bf16.msra.mxu0 0
        %510 = vmatprep.subr.bf16.mxu0 0
        %511 = vmatpush1.bf16.msra.mxu0 0
        %512 = vmatprep.subr.bf16.mxu0 0
        %513 = vmatpush1.bf16.msra.mxu0 0
        %514 = vmatprep.subr.bf16.mxu0 0
        %515 = vmatpush1.bf16.msra.mxu0 %v457
        %516 = vmatprep.subr.bf16.mxu0 0
        %517 = vmatpush2.bf16.msra.mxu0 0
        %518 = vmatprep.subr.bf16.mxu0 0
        %519 = vmatpush2.bf16.msra.mxu0 0
        %520 = vmatprep.subr.bf16.mxu0 0
        %521 = vmatpush2.bf16.msra.mxu0 0
        %522 = vmatprep.subr.bf16.mxu0 0
        %523 = vmatpush2.bf16.msra.mxu0 0
        %524 = vmatprep.subr.bf16.mxu0 0
        %525 = vmatpush2.bf16.msra.mxu0 0
        %526 = vmatprep.subr.bf16.mxu0 0
        %527 = vmatpush2.bf16.msra.mxu0 0
        %528 = vmatprep.subr.bf16.mxu0 0
        %529 = vmatpush2.bf16.msra.mxu0 0
        %530 = vmatprep.subr.bf16.mxu0 0
        %531 = vmatpush2.bf16.msra.mxu0 0
        %532 = vmatprep.mubr.bf16.mxu0 0
        %533 = vmatmul.mubr.bf16.gmra.mxu0 %v448
        %v534 = vpop.f32.mrf.mxu0
        %v535 = vadd.f32 0.0, %v534
        %v536 = vpop.f32.mrf.mxu0
        %v537 = vpop.f32.mrf.mxu0
        %v538 = vpop.f32.mrf.mxu0
        %539 = vdwg.mxu0
        %v540 = vadd.f32 %v368, %v494
        %v541 = vadd.f32 %v370, %v496
        %v542 = vadd.f32 %v409, %v535
        %v543 = vld [vmem:[%s168] sm:$0xff]
        %s544 = scalar_lea.vmem %s172, 12
        %v545 = vld [vmem:[%s544] sm:$0xf]
        %v547 = vcombine.high %v543, %v543
        %v549 = vunpack.c.l.s4 1983009808
        %v550 = vunpack.c.0.s8 %v549
        %v551 = vlaneseq
        %v552 = vshrl.u32 %v551, 7
        %v553 = vsub.s32 %v550, %v552
        %v554 = vrot.slane %v543, %v553
        %v556 = vunpack.c.l.s4 1983009808
        %v557 = vunpack.c.0.s8 %v556
        %v558 = vlaneseq
        %v559 = vshrl.u32 %v558, 7
        %v560 = vsub.s32 %v557, %v559
        %v561 = vrot.slane %v547, %v560
        %v562 = vcombine.high %v554, %v554
        %v563 = vcombine.high %v561, %v561
        %564 = vrot.lane.b32.xlu0 %v554, 110
        %v565 = vpop.permute.xlu0 %564
        %566 = vrot.lane.b32.xlu0 %v562, 110
        %v567 = vpop.permute.xlu0 %566
        %568 = vrot.lane.b32.xlu0 %v561, 110
        %v569 = vpop.permute.xlu0 %568
        %570 = vrot.lane.b32.xlu0 %v563, 110
        %v571 = vpop.permute.xlu0 %570
        %vm572 = vcmask 900096
        %v573 = vsel %vm572, %v565, %v567
        %v574 = vsel %vm572, %v567, %v569
        %v575 = vsel %vm572, %v569, %v571
        %v577 = vsel %vm209, %v545, 0
        %v580 = vsel %vm213, %v573, 0
        %v583 = vsel %vm213, %v574, 0
        %v586 = vsel %vm213, %v575, 0
        %588 = vmatprep.subr.bf16.mxu0 0
        %589 = vmatpush1.bf16.msra.mxu0 0
        %590 = vmatprep.subr.bf16.mxu0 0
        %591 = vmatpush1.bf16.msra.mxu0 0
        %592 = vmatprep.subr.bf16.mxu0 0
        %593 = vmatpush1.bf16.msra.mxu0 0
        %594 = vmatprep.subr.bf16.mxu0 0
        %595 = vmatpush1.bf16.msra.mxu0 0
        %596 = vmatprep.subr.bf16.mxu0 0
        %597 = vmatpush1.bf16.msra.mxu0 0
        %598 = vmatprep.subr.bf16.mxu0 0
        %599 = vmatpush1.bf16.msra.mxu0 0
        %600 = vmatprep.subr.bf16.mxu0 0
        %601 = vmatpush1.bf16.msra.mxu0 0
        %602 = vmatprep.subr.bf16.mxu0 %v583
        %603 = vmatpush1.bf16.msra.mxu0 %v580
        %604 = vmatprep.subr.bf16.mxu0 0
        %605 = vmatpush2.bf16.msra.mxu0 0
        %606 = vmatprep.subr.bf16.mxu0 0
        %607 = vmatpush2.bf16.msra.mxu0 0
        %608 = vmatprep.subr.bf16.mxu0 0
        %609 = vmatpush2.bf16.msra.mxu0 0
        %610 = vmatprep.subr.bf16.mxu0 0
        %611 = vmatpush2.bf16.msra.mxu0 0
        %612 = vmatprep.subr.bf16.mxu0 0
        %613 = vmatpush2.bf16.msra.mxu0 0
        %614 = vmatprep.subr.bf16.mxu0 0
        %615 = vmatpush2.bf16.msra.mxu0 0
        %616 = vmatprep.subr.bf16.mxu0 0
        %617 = vmatpush2.bf16.msra.mxu0 0
        %618 = vmatprep.subr.bf16.mxu0 0
        %619 = vmatpush2.bf16.msra.mxu0 0
        %620 = vmatprep.mubr.bf16.mxu0 0
        %621 = vmatmul.mubr.bf16.gmra.mxu0 %v577
        %v622 = vpop.f32.mrf.mxu0
        %v623 = vadd.f32 0.0, %v622
        %v624 = vpop.f32.mrf.mxu0
        %v625 = vadd.f32 0.0, %v624
        %v626 = vpop.f32.mrf.mxu0
        %v627 = vpop.f32.mrf.mxu0
        %628 = vdwg.mxu0
        %629 = vmatprep.subr.bf16.mxu0 0
        %630 = vmatpush1.bf16.msra.mxu0 0
        %631 = vmatprep.subr.bf16.mxu0 0
        %632 = vmatpush1.bf16.msra.mxu0 0
        %633 = vmatprep.subr.bf16.mxu0 0
        %634 = vmatpush1.bf16.msra.mxu0 0
        %635 = vmatprep.subr.bf16.mxu0 0
        %636 = vmatpush1.bf16.msra.mxu0 0
        %637 = vmatprep.subr.bf16.mxu0 0
        %638 = vmatpush1.bf16.msra.mxu0 0
        %639 = vmatprep.subr.bf16.mxu0 0
        %640 = vmatpush1.bf16.msra.mxu0 0
        %641 = vmatprep.subr.bf16.mxu0 0
        %642 = vmatpush1.bf16.msra.mxu0 0
        %643 = vmatprep.subr.bf16.mxu0 0
        %644 = vmatpush1.bf16.msra.mxu0 %v586
        %645 = vmatprep.subr.bf16.mxu0 0
        %646 = vmatpush2.bf16.msra.mxu0 0
        %647 = vmatprep.subr.bf16.mxu0 0
        %648 = vmatpush2.bf16.msra.mxu0 0
        %649 = vmatprep.subr.bf16.mxu0 0
        %650 = vmatpush2.bf16.msra.mxu0 0
        %651 = vmatprep.subr.bf16.mxu0 0
        %652 = vmatpush2.bf16.msra.mxu0 0
        %653 = vmatprep.subr.bf16.mxu0 0
        %654 = vmatpush2.bf16.msra.mxu0 0
        %655 = vmatprep.subr.bf16.mxu0 0
        %656 = vmatpush2.bf16.msra.mxu0 0
        %657 = vmatprep.subr.bf16.mxu0 0
        %658 = vmatpush2.bf16.msra.mxu0 0
        %659 = vmatprep.subr.bf16.mxu0 0
        %660 = vmatpush2.bf16.msra.mxu0 0
        %661 = vmatprep.mubr.bf16.mxu0 0
        %662 = vmatmul.mubr.bf16.gmra.mxu0 %v577
        %v663 = vpop.f32.mrf.mxu0
        %v664 = vadd.f32 0.0, %v663
        %v665 = vpop.f32.mrf.mxu0
        %v666 = vpop.f32.mrf.mxu0
        %v667 = vpop.f32.mrf.mxu0
        %668 = vdwg.mxu0
        %v669 = vadd.f32 %v540, %v623
        %v670 = vadd.f32 %v541, %v625
        %v671 = vadd.f32 %v542, %v664
        %v672 = vld [vmem:[%s168] sm:$0xff]
        %s673 = scalar_lea.vmem %s172, 16
        %v674 = vld [vmem:[%s673] sm:$0xf]
        %v676 = vcombine.high %v672, %v672
        %v678 = vunpack.c.l.s4 1983009808
        %v679 = vunpack.c.0.s8 %v678
        %v680 = vlaneseq
        %v681 = vshrl.u32 %v680, 7
        %v682 = vsub.s32 %v679, %v681
        %v683 = vrot.slane %v672, %v682
        %v685 = vunpack.c.l.s4 1983009808
        %v686 = vunpack.c.0.s8 %v685
        %v687 = vlaneseq
        %v688 = vshrl.u32 %v687, 7
        %v689 = vsub.s32 %v686, %v688
        %v690 = vrot.slane %v676, %v689
        %v691 = vcombine.high %v683, %v683
        %v692 = vcombine.high %v690, %v690
        %693 = vrot.lane.b32.xlu0 %v683, 109
        %v694 = vpop.permute.xlu0 %693
        %695 = vrot.lane.b32.xlu0 %v691, 109
        %v696 = vpop.permute.xlu0 %695
        %697 = vrot.lane.b32.xlu0 %v690, 109
        %v698 = vpop.permute.xlu0 %697
        %699 = vrot.lane.b32.xlu0 %v692, 109
        %v700 = vpop.permute.xlu0 %699
        %vm701 = vcmask 891904
        %v702 = vsel %vm701, %v694, %v696
        %v703 = vsel %vm701, %v696, %v698
        %v704 = vsel %vm701, %v698, %v700
        %v706 = vsel %vm209, %v674, 0
        %v709 = vsel %vm213, %v702, 0
        %v712 = vsel %vm213, %v703, 0
        %v715 = vsel %vm213, %v704, 0
        %717 = vmatprep.subr.bf16.mxu0 0
        %718 = vmatpush1.bf16.msra.mxu0 0
        %719 = vmatprep.subr.bf16.mxu0 0
        %720 = vmatpush1.bf16.msra.mxu0 0
        %721 = vmatprep.subr.bf16.mxu0 0
        %722 = vmatpush1.bf16.msra.mxu0 0
        %723 = vmatprep.subr.bf16.mxu0 0
        %724 = vmatpush1.bf16.msra.mxu0 0
        %725 = vmatprep.subr.bf16.mxu0 0
        %726 = vmatpush1.bf16.msra.mxu0 0
        %727 = vmatprep.subr.bf16.mxu0 0
        %728 = vmatpush1.bf16.msra.mxu0 0
        %729 = vmatprep.subr.bf16.mxu0 0
        %730 = vmatpush1.bf16.msra.mxu0 0
        %731 = vmatprep.subr.bf16.mxu0 %v712
        %732 = vmatpush1.bf16.msra.mxu0 %v709
        %733 = vmatprep.subr.bf16.mxu0 0
        %734 = vmatpush2.bf16.msra.mxu0 0
        %735 = vmatprep.subr.bf16.mxu0 0
        %736 = vmatpush2.bf16.msra.mxu0 0
        %737 = vmatprep.subr.bf16.mxu0 0
        %738 = vmatpush2.bf16.msra.mxu0 0
        %739 = vmatprep.subr.bf16.mxu0 0
        %740 = vmatpush2.bf16.msra.mxu0 0
        %741 = vmatprep.subr.bf16.mxu0 0
        %742 = vmatpush2.bf16.msra.mxu0 0
        %743 = vmatprep.subr.bf16.mxu0 0
        %744 = vmatpush2.bf16.msra.mxu0 0
        %745 = vmatprep.subr.bf16.mxu0 0
        %746 = vmatpush2.bf16.msra.mxu0 0
        %747 = vmatprep.subr.bf16.mxu0 0
        %748 = vmatpush2.bf16.msra.mxu0 0
        %749 = vmatprep.mubr.bf16.mxu0 0
        %750 = vmatmul.mubr.bf16.gmra.mxu0 %v706
        %v751 = vpop.f32.mrf.mxu0
        %v752 = vadd.f32 0.0, %v751
        %v753 = vpop.f32.mrf.mxu0
        %v754 = vadd.f32 0.0, %v753
        %v755 = vpop.f32.mrf.mxu0
        %v756 = vpop.f32.mrf.mxu0
        %757 = vdwg.mxu0
        %758 = vmatprep.subr.bf16.mxu0 0
        %759 = vmatpush1.bf16.msra.mxu0 0
        %760 = vmatprep.subr.bf16.mxu0 0
        %761 = vmatpush1.bf16.msra.mxu0 0
        %762 = vmatprep.subr.bf16.mxu0 0
        %763 = vmatpush1.bf16.msra.mxu0 0
        %764 = vmatprep.subr.bf16.mxu0 0
        %765 = vmatpush1.bf16.msra.mxu0 0
        %766 = vmatprep.subr.bf16.mxu0 0
        %767 = vmatpush1.bf16.msra.mxu0 0
        %768 = vmatprep.subr.bf16.mxu0 0
        %769 = vmatpush1.bf16.msra.mxu0 0
        %770 = vmatprep.subr.bf16.mxu0 0
        %771 = vmatpush1.bf16.msra.mxu0 0
        %772 = vmatprep.subr.bf16.mxu0 0
        %773 = vmatpush1.bf16.msra.mxu0 %v715
        %774 = vmatprep.subr.bf16.mxu0 0
        %775 = vmatpush2.bf16.msra.mxu0 0
        %776 = vmatprep.subr.bf16.mxu0 0
        %777 = vmatpush2.bf16.msra.mxu0 0
        %778 = vmatprep.subr.bf16.mxu0 0
        %779 = vmatpush2.bf16.msra.mxu0 0
        %780 = vmatprep.subr.bf16.mxu0 0
        %781 = vmatpush2.bf16.msra.mxu0 0
        %782 = vmatprep.subr.bf16.mxu0 0
        %783 = vmatpush2.bf16.msra.mxu0 0
        %784 = vmatprep.subr.bf16.mxu0 0
        %785 = vmatpush2.bf16.msra.mxu0 0
        %786 = vmatprep.subr.bf16.mxu0 0
        %787 = vmatpush2.bf16.msra.mxu0 0
        %788 = vmatprep.subr.bf16.mxu0 0
        %789 = vmatpush2.bf16.msra.mxu0 0
        %790 = vmatprep.mubr.bf16.mxu0 0
        %791 = vmatmul.mubr.bf16.gmra.mxu0 %v706
        %v792 = vpop.f32.mrf.mxu0
        %v793 = vadd.f32 0.0, %v792
        %v794 = vpop.f32.mrf.mxu0
        %v795 = vpop.f32.mrf.mxu0
        %v796 = vpop.f32.mrf.mxu0
        %797 = vdwg.mxu0
        %v798 = vadd.f32 %v669, %v752
        %v799 = vadd.f32 %v670, %v754
        %v800 = vadd.f32 %v671, %v793
        %v801 = vld [vmem:[%s168] sm:$0xff]
        %s802 = scalar_lea.vmem %s172, 20
        %v803 = vld [vmem:[%s802] sm:$0xf]
        %v805 = vcombine.high %v801, %v801
        %v807 = vunpack.c.l.s4 1983009808
        %v808 = vunpack.c.0.s8 %v807
        %v809 = vlaneseq
        %v810 = vshrl.u32 %v809, 7
        %v811 = vsub.s32 %v808, %v810
        %v812 = vrot.slane %v801, %v811
        %v814 = vunpack.c.l.s4 1983009808
        %v815 = vunpack.c.0.s8 %v814
        %v816 = vlaneseq
        %v817 = vshrl.u32 %v816, 7
        %v818 = vsub.s32 %v815, %v817
        %v819 = vrot.slane %v805, %v818
        %v820 = vcombine.high %v812, %v812
        %v821 = vcombine.high %v819, %v819
        %822 = vrot.lane.b32.xlu0 %v812, 108
        %v823 = vpop.permute.xlu0 %822
        %824 = vrot.lane.b32.xlu0 %v820, 108
        %v825 = vpop.permute.xlu0 %824
        %826 = vrot.lane.b32.xlu0 %v819, 108
        %v827 = vpop.permute.xlu0 %826
        %828 = vrot.lane.b32.xlu0 %v821, 108
        %v829 = vpop.permute.xlu0 %828
        %vm830 = vcmask 883712
        %v831 = vsel %vm830, %v823, %v825
        %v832 = vsel %vm830, %v825, %v827
        %v833 = vsel %vm830, %v827, %v829
        %v835 = vsel %vm209, %v803, 0
        %v838 = vsel %vm213, %v831, 0
        %v841 = vsel %vm213, %v832, 0
        %v844 = vsel %vm213, %v833, 0
        %846 = vmatprep.subr.bf16.mxu0 0
        %847 = vmatpush1.bf16.msra.mxu0 0
        %848 = vmatprep.subr.bf16.mxu0 0
        %849 = vmatpush1.bf16.msra.mxu0 0
        %850 = vmatprep.subr.bf16.mxu0 0
        %851 = vmatpush1.bf16.msra.mxu0 0
        %852 = vmatprep.subr.bf16.mxu0 0
        %853 = vmatpush1.bf16.msra.mxu0 0
        %854 = vmatprep.subr.bf16.mxu0 0
        %855 = vmatpush1.bf16.msra.mxu0 0
        %856 = vmatprep.subr.bf16.mxu0 0
        %857 = vmatpush1.bf16.msra.mxu0 0
        %858 = vmatprep.subr.bf16.mxu0 0
        %859 = vmatpush1.bf16.msra.mxu0 0
        %860 = vmatprep.subr.bf16.mxu0 %v841
        %861 = vmatpush1.bf16.msra.mxu0 %v838
        %862 = vmatprep.subr.bf16.mxu0 0
        %863 = vmatpush2.bf16.msra.mxu0 0
        %864 = vmatprep.subr.bf16.mxu0 0
        %865 = vmatpush2.bf16.msra.mxu0 0
        %866 = vmatprep.subr.bf16.mxu0 0
        %867 = vmatpush2.bf16.msra.mxu0 0
        %868 = vmatprep.subr.bf16.mxu0 0
        %869 = vmatpush2.bf16.msra.mxu0 0
        %870 = vmatprep.subr.bf16.mxu0 0
        %871 = vmatpush2.bf16.msra.mxu0 0
        %872 = vmatprep.subr.bf16.mxu0 0
        %873 = vmatpush2.bf16.msra.mxu0 0
        %874 = vmatprep.subr.bf16.mxu0 0
        %875 = vmatpush2.bf16.msra.mxu0 0
        %876 = vmatprep.subr.bf16.mxu0 0
        %877 = vmatpush2.bf16.msra.mxu0 0
        %878 = vmatprep.mubr.bf16.mxu0 0
        %879 = vmatmul.mubr.bf16.gmra.mxu0 %v835
        %v880 = vpop.f32.mrf.mxu0
        %v881 = vadd.f32 0.0, %v880
        %v882 = vpop.f32.mrf.mxu0
        %v883 = vadd.f32 0.0, %v882
        %v884 = vpop.f32.mrf.mxu0
        %v885 = vpop.f32.mrf.mxu0
        %886 = vdwg.mxu0
        %887 = vmatprep.subr.bf16.mxu0 0
        %888 = vmatpush1.bf16.msra.mxu0 0
        %889 = vmatprep.subr.bf16.mxu0 0
        %890 = vmatpush1.bf16.msra.mxu0 0
        %891 = vmatprep.subr.bf16.mxu0 0
        %892 = vmatpush1.bf16.msra.mxu0 0
        %893 = vmatprep.subr.bf16.mxu0 0
        %894 = vmatpush1.bf16.msra.mxu0 0
        %895 = vmatprep.subr.bf16.mxu0 0
        %896 = vmatpush1.bf16.msra.mxu0 0
        %897 = vmatprep.subr.bf16.mxu0 0
        %898 = vmatpush1.bf16.msra.mxu0 0
        %899 = vmatprep.subr.bf16.mxu0 0
        %900 = vmatpush1.bf16.msra.mxu0 0
        %901 = vmatprep.subr.bf16.mxu0 0
        %902 = vmatpush1.bf16.msra.mxu0 %v844
        %903 = vmatprep.subr.bf16.mxu0 0
        %904 = vmatpush2.bf16.msra.mxu0 0
        %905 = vmatprep.subr.bf16.mxu0 0
        %906 = vmatpush2.bf16.msra.mxu0 0
        %907 = vmatprep.subr.bf16.mxu0 0
        %908 = vmatpush2.bf16.msra.mxu0 0
        %909 = vmatprep.subr.bf16.mxu0 0
        %910 = vmatpush2.bf16.msra.mxu0 0
        %911 = vmatprep.subr.bf16.mxu0 0
        %912 = vmatpush2.bf16.msra.mxu0 0
        %913 = vmatprep.subr.bf16.mxu0 0
        %914 = vmatpush2.bf16.msra.mxu0 0
        %915 = vmatprep.subr.bf16.mxu0 0
        %916 = vmatpush2.bf16.msra.mxu0 0
        %917 = vmatprep.subr.bf16.mxu0 0
        %918 = vmatpush2.bf16.msra.mxu0 0
        %919 = vmatprep.mubr.bf16.mxu0 0
        %920 = vmatmul.mubr.bf16.gmra.mxu0 %v835
        %v921 = vpop.f32.mrf.mxu0
        %v922 = vadd.f32 0.0, %v921
        %v923 = vpop.f32.mrf.mxu0
        %v924 = vpop.f32.mrf.mxu0
        %v925 = vpop.f32.mrf.mxu0
        %926 = vdwg.mxu0
        %v927 = vadd.f32 %v798, %v881
        %v928 = vadd.f32 %v799, %v883
        %v929 = vadd.f32 %v800, %v922
        %v930 = vld [vmem:[%s168] sm:$0xff]
        %s931 = scalar_lea.vmem %s172, 24
        %v932 = vld [vmem:[%s931] sm:$0xf]
        %v934 = vcombine.high %v930, %v930
        %v936 = vunpack.c.l.s4 1983009808
        %v937 = vunpack.c.0.s8 %v936
        %v938 = vlaneseq
        %v939 = vshrl.u32 %v938, 7
        %v940 = vsub.s32 %v937, %v939
        %v941 = vrot.slane %v930, %v940
        %v943 = vunpack.c.l.s4 1983009808
        %v944 = vunpack.c.0.s8 %v943
        %v945 = vlaneseq
        %v946 = vshrl.u32 %v945, 7
        %v947 = vsub.s32 %v944, %v946
        %v948 = vrot.slane %v934, %v947
        %v949 = vcombine.high %v941, %v941
        %v950 = vcombine.high %v948, %v948
        %951 = vrot.lane.b32.xlu0 %v941, 92
        %v952 = vpop.permute.xlu0 %951
        %953 = vrot.lane.b32.xlu0 %v949, 92
        %v954 = vpop.permute.xlu0 %953
        %955 = vrot.lane.b32.xlu0 %v948, 92
        %v956 = vpop.permute.xlu0 %955
        %957 = vrot.lane.b32.xlu0 %v950, 92
        %v958 = vpop.permute.xlu0 %957
        %vm959 = vcmask 752640
        %v960 = vsel %vm959, %v952, %v954
        %v961 = vsel %vm959, %v954, %v956
        %v962 = vsel %vm959, %v956, %v958
        %v964 = vsel %vm209, %v932, 0
        %v967 = vsel %vm213, %v960, 0
        %v970 = vsel %vm213, %v961, 0
        %v973 = vsel %vm213, %v962, 0
        %975 = vmatprep.subr.bf16.mxu0 0
        %976 = vmatpush1.bf16.msra.mxu0 0
        %977 = vmatprep.subr.bf16.mxu0 0
        %978 = vmatpush1.bf16.msra.mxu0 0
        %979 = vmatprep.subr.bf16.mxu0 0
        %980 = vmatpush1.bf16.msra.mxu0 0
        %981 = vmatprep.subr.bf16.mxu0 0
        %982 = vmatpush1.bf16.msra.mxu0 0
        %983 = vmatprep.subr.bf16.mxu0 0
        %984 = vmatpush1.bf16.msra.mxu0 0
        %985 = vmatprep.subr.bf16.mxu0 0
        %986 = vmatpush1.bf16.msra.mxu0 0
        %987 = vmatprep.subr.bf16.mxu0 0
        %988 = vmatpush1.bf16.msra.mxu0 0
        %989 = vmatprep.subr.bf16.mxu0 %v970
        %990 = vmatpush1.bf16.msra.mxu0 %v967
        %991 = vmatprep.subr.bf16.mxu0 0
        %992 = vmatpush2.bf16.msra.mxu0 0
        %993 = vmatprep.subr.bf16.mxu0 0
        %994 = vmatpush2.bf16.msra.mxu0 0
        %995 = vmatprep.subr.bf16.mxu0 0
        %996 = vmatpush2.bf16.msra.mxu0 0
        %997 = vmatprep.subr.bf16.mxu0 0
        %998 = vmatpush2.bf16.msra.mxu0 0
        %999 = vmatprep.subr.bf16.mxu0 0
        %1000 = vmatpush2.bf16.msra.mxu0 0
        %1001 = vmatprep.subr.bf16.mxu0 0
        %1002 = vmatpush2.bf16.msra.mxu0 0
        %1003 = vmatprep.subr.bf16.mxu0 0
        %1004 = vmatpush2.bf16.msra.mxu0 0
        %1005 = vmatprep.subr.bf16.mxu0 0
        %1006 = vmatpush2.bf16.msra.mxu0 0
        %1007 = vmatprep.mubr.bf16.mxu0 0
        %1008 = vmatmul.mubr.bf16.gmra.mxu0 %v964
        %v1009 = vpop.f32.mrf.mxu0
        %v1010 = vadd.f32 0.0, %v1009
        %v1011 = vpop.f32.mrf.mxu0
        %v1012 = vadd.f32 0.0, %v1011
        %v1013 = vpop.f32.mrf.mxu0
        %v1014 = vpop.f32.mrf.mxu0
        %1015 = vdwg.mxu0
        %1016 = vmatprep.subr.bf16.mxu0 0
        %1017 = vmatpush1.bf16.msra.mxu0 0
        %1018 = vmatprep.subr.bf16.mxu0 0
        %1019 = vmatpush1.bf16.msra.mxu0 0
        %1020 = vmatprep.subr.bf16.mxu0 0
        %1021 = vmatpush1.bf16.msra.mxu0 0
        %1022 = vmatprep.subr.bf16.mxu0 0
        %1023 = vmatpush1.bf16.msra.mxu0 0
        %1024 = vmatprep.subr.bf16.mxu0 0
        %1025 = vmatpush1.bf16.msra.mxu0 0
        %1026 = vmatprep.subr.bf16.mxu0 0
        %1027 = vmatpush1.bf16.msra.mxu0 0
        %1028 = vmatprep.subr.bf16.mxu0 0
        %1029 = vmatpush1.bf16.msra.mxu0 0
        %1030 = vmatprep.subr.bf16.mxu0 0
        %1031 = vmatpush1.bf16.msra.mxu0 %v973
        %1032 = vmatprep.subr.bf16.mxu0 0
        %1033 = vmatpush2.bf16.msra.mxu0 0
        %1034 = vmatprep.subr.bf16.mxu0 0
        %1035 = vmatpush2.bf16.msra.mxu0 0
        %1036 = vmatprep.subr.bf16.mxu0 0
        %1037 = vmatpush2.bf16.msra.mxu0 0
        %1038 = vmatprep.subr.bf16.mxu0 0
        %1039 = vmatpush2.bf16.msra.mxu0 0
        %1040 = vmatprep.subr.bf16.mxu0 0
        %1041 = vmatpush2.bf16.msra.mxu0 0
        %1042 = vmatprep.subr.bf16.mxu0 0
        %1043 = vmatpush2.bf16.msra.mxu0 0
        %1044 = vmatprep.subr.bf16.mxu0 0
        %1045 = vmatpush2.bf16.msra.mxu0 0
        %1046 = vmatprep.subr.bf16.mxu0 0
        %1047 = vmatpush2.bf16.msra.mxu0 0
        %1048 = vmatprep.mubr.bf16.mxu0 0
        %1049 = vmatmul.mubr.bf16.gmra.mxu0 %v964
        %v1050 = vpop.f32.mrf.mxu0
        %v1051 = vadd.f32 0.0, %v1050
        %v1052 = vpop.f32.mrf.mxu0
        %v1053 = vpop.f32.mrf.mxu0
        %v1054 = vpop.f32.mrf.mxu0
        %1055 = vdwg.mxu0
        %v1056 = vadd.f32 %v927, %v1010
        %v1057 = vadd.f32 %v928, %v1012
        %v1058 = vadd.f32 %v929, %v1051
        %v1059 = vld [vmem:[%s168] sm:$0xff]
        %s1060 = scalar_lea.vmem %s172, 28
        %v1061 = vld [vmem:[%s1060] sm:$0xf]
        %v1063 = vcombine.high %v1059, %v1059
        %v1065 = vunpack.c.l.s4 1983009808
        %v1066 = vunpack.c.0.s8 %v1065
        %v1067 = vlaneseq
        %v1068 = vshrl.u32 %v1067, 7
        %v1069 = vsub.s32 %v1066, %v1068
        %v1070 = vrot.slane %v1059, %v1069
        %v1072 = vunpack.c.l.s4 1983009808
        %v1073 = vunpack.c.0.s8 %v1072
        %v1074 = vlaneseq
        %v1075 = vshrl.u32 %v1074, 7
        %v1076 = vsub.s32 %v1073, %v1075
        %v1077 = vrot.slane %v1063, %v1076
        %v1078 = vcombine.high %v1070, %v1070
        %v1079 = vcombine.high %v1077, %v1077
        %1080 = vrot.lane.b32.xlu0 %v1070, 91
        %v1081 = vpop.permute.xlu0 %1080
        %1082 = vrot.lane.b32.xlu0 %v1078, 91
        %v1083 = vpop.permute.xlu0 %1082
        %1084 = vrot.lane.b32.xlu0 %v1077, 91
        %v1085 = vpop.permute.xlu0 %1084
        %1086 = vrot.lane.b32.xlu0 %v1079, 91
        %v1087 = vpop.permute.xlu0 %1086
        %vm1088 = vcmask 744448
        %v1089 = vsel %vm1088, %v1081, %v1083
        %v1090 = vsel %vm1088, %v1083, %v1085
        %v1091 = vsel %vm1088, %v1085, %v1087
        %v1093 = vsel %vm209, %v1061, 0
        %v1096 = vsel %vm213, %v1089, 0
        %v1099 = vsel %vm213, %v1090, 0
        %v1102 = vsel %vm213, %v1091, 0
        %1104 = vmatprep.subr.bf16.mxu0 0
        %1105 = vmatpush1.bf16.msra.mxu0 0
        %1106 = vmatprep.subr.bf16.mxu0 0
        %1107 = vmatpush1.bf16.msra.mxu0 0
        %1108 = vmatprep.subr.bf16.mxu0 0
        %1109 = vmatpush1.bf16.msra.mxu0 0
        %1110 = vmatprep.subr.bf16.mxu0 0
        %1111 = vmatpush1.bf16.msra.mxu0 0
        %1112 = vmatprep.subr.bf16.mxu0 0
        %1113 = vmatpush1.bf16.msra.mxu0 0
        %1114 = vmatprep.subr.bf16.mxu0 0
        %1115 = vmatpush1.bf16.msra.mxu0 0
        %1116 = vmatprep.subr.bf16.mxu0 0
        %1117 = vmatpush1.bf16.msra.mxu0 0
        %1118 = vmatprep.subr.bf16.mxu0 %v1099
        %1119 = vmatpush1.bf16.msra.mxu0 %v1096
        %1120 = vmatprep.subr.bf16.mxu0 0
        %1121 = vmatpush2.bf16.msra.mxu0 0
        %1122 = vmatprep.subr.bf16.mxu0 0
        %1123 = vmatpush2.bf16.msra.mxu0 0
        %1124 = vmatprep.subr.bf16.mxu0 0
        %1125 = vmatpush2.bf16.msra.mxu0 0
        %1126 = vmatprep.subr.bf16.mxu0 0
        %1127 = vmatpush2.bf16.msra.mxu0 0
        %1128 = vmatprep.subr.bf16.mxu0 0
        %1129 = vmatpush2.bf16.msra.mxu0 0
        %1130 = vmatprep.subr.bf16.mxu0 0
        %1131 = vmatpush2.bf16.msra.mxu0 0
        %1132 = vmatprep.subr.bf16.mxu0 0
        %1133 = vmatpush2.bf16.msra.mxu0 0
        %1134 = vmatprep.subr.bf16.mxu0 0
        %1135 = vmatpush2.bf16.msra.mxu0 0
        %1136 = vmatprep.mubr.bf16.mxu0 0
        %1137 = vmatmul.mubr.bf16.gmra.mxu0 %v1093
        %v1138 = vpop.f32.mrf.mxu0
        %v1139 = vadd.f32 0.0, %v1138
        %v1140 = vpop.f32.mrf.mxu0
        %v1141 = vadd.f32 0.0, %v1140
        %v1142 = vpop.f32.mrf.mxu0
        %v1143 = vpop.f32.mrf.mxu0
        %1144 = vdwg.mxu0
        %1145 = vmatprep.subr.bf16.mxu0 0
        %1146 = vmatpush1.bf16.msra.mxu0 0
        %1147 = vmatprep.subr.bf16.mxu0 0
        %1148 = vmatpush1.bf16.msra.mxu0 0
        %1149 = vmatprep.subr.bf16.mxu0 0
        %1150 = vmatpush1.bf16.msra.mxu0 0
        %1151 = vmatprep.subr.bf16.mxu0 0
        %1152 = vmatpush1.bf16.msra.mxu0 0
        %1153 = vmatprep.subr.bf16.mxu0 0
        %1154 = vmatpush1.bf16.msra.mxu0 0
        %1155 = vmatprep.subr.bf16.mxu0 0
        %1156 = vmatpush1.bf16.msra.mxu0 0
        %1157 = vmatprep.subr.bf16.mxu0 0
        %1158 = vmatpush1.bf16.msra.mxu0 0
        %1159 = vmatprep.subr.bf16.mxu0 0
        %1160 = vmatpush1.bf16.msra.mxu0 %v1102
        %1161 = vmatprep.subr.bf16.mxu0 0
        %1162 = vmatpush2.bf16.msra.mxu0 0
        %1163 = vmatprep.subr.bf16.mxu0 0
        %1164 = vmatpush2.bf16.msra.mxu0 0
        %1165 = vmatprep.subr.bf16.mxu0 0
        %1166 = vmatpush2.bf16.msra.mxu0 0
        %1167 = vmatprep.subr.bf16.mxu0 0
        %1168 = vmatpush2.bf16.msra.mxu0 0
        %1169 = vmatprep.subr.bf16.mxu0 0
        %1170 = vmatpush2.bf16.msra.mxu0 0
        %1171 = vmatprep.subr.bf16.mxu0 0
        %1172 = vmatpush2.bf16.msra.mxu0 0
        %1173 = vmatprep.subr.bf16.mxu0 0
        %1174 = vmatpush2.bf16.msra.mxu0 0
        %1175 = vmatprep.subr.bf16.mxu0 0
        %1176 = vmatpush2.bf16.msra.mxu0 0
        %1177 = vmatprep.mubr.bf16.mxu0 0
        %1178 = vmatmul.mubr.bf16.gmra.mxu0 %v1093
        %v1179 = vpop.f32.mrf.mxu0
        %v1180 = vadd.f32 0.0, %v1179
        %v1181 = vpop.f32.mrf.mxu0
        %v1182 = vpop.f32.mrf.mxu0
        %v1183 = vpop.f32.mrf.mxu0
        %1184 = vdwg.mxu0
        %v1185 = vadd.f32 %v1056, %v1139
        %v1186 = vadd.f32 %v1057, %v1141
        %v1187 = vadd.f32 %v1058, %v1180
        %v1188 = vld [vmem:[%s168] sm:$0xff]
        %s1189 = scalar_lea.vmem %s172, 32
        %v1190 = vld [vmem:[%s1189] sm:$0xf]
        %v1192 = vcombine.high %v1188, %v1188
        %v1194 = vunpack.c.l.s4 1983009808
        %v1195 = vunpack.c.0.s8 %v1194
        %v1196 = vlaneseq
        %v1197 = vshrl.u32 %v1196, 7
        %v1198 = vsub.s32 %v1195, %v1197
        %v1199 = vrot.slane %v1188, %v1198
        %v1201 = vunpack.c.l.s4 1983009808
        %v1202 = vunpack.c.0.s8 %v1201
        %v1203 = vlaneseq
        %v1204 = vshrl.u32 %v1203, 7
        %v1205 = vsub.s32 %v1202, %v1204
        %v1206 = vrot.slane %v1192, %v1205
        %v1207 = vcombine.high %v1199, %v1199
        %v1208 = vcombine.high %v1206, %v1206
        %1209 = vrot.lane.b32.xlu0 %v1199, 90
        %v1210 = vpop.permute.xlu0 %1209
        %1211 = vrot.lane.b32.xlu0 %v1207, 90
        %v1212 = vpop.permute.xlu0 %1211
        %1213 = vrot.lane.b32.xlu0 %v1206, 90
        %v1214 = vpop.permute.xlu0 %1213
        %1215 = vrot.lane.b32.xlu0 %v1208, 90
        %v1216 = vpop.permute.xlu0 %1215
        %vm1217 = vcmask 736256
        %v1218 = vsel %vm1217, %v1210, %v1212
        %v1219 = vsel %vm1217, %v1212, %v1214
        %v1220 = vsel %vm1217, %v1214, %v1216
        %v1222 = vsel %vm209, %v1190, 0
        %v1225 = vsel %vm213, %v1218, 0
        %v1228 = vsel %vm213, %v1219, 0
        %v1231 = vsel %vm213, %v1220, 0
        %1233 = vmatprep.subr.bf16.mxu0 0
        %1234 = vmatpush1.bf16.msra.mxu0 0
        %1235 = vmatprep.subr.bf16.mxu0 0
        %1236 = vmatpush1.bf16.msra.mxu0 0
        %1237 = vmatprep.subr.bf16.mxu0 0
        %1238 = vmatpush1.bf16.msra.mxu0 0
        %1239 = vmatprep.subr.bf16.mxu0 0
        %1240 = vmatpush1.bf16.msra.mxu0 0
        %1241 = vmatprep.subr.bf16.mxu0 0
        %1242 = vmatpush1.bf16.msra.mxu0 0
        %1243 = vmatprep.subr.bf16.mxu0 0
        %1244 = vmatpush1.bf16.msra.mxu0 0
        %1245 = vmatprep.subr.bf16.mxu0 0
        %1246 = vmatpush1.bf16.msra.mxu0 0
        %1247 = vmatprep.subr.bf16.mxu0 %v1228
        %1248 = vmatpush1.bf16.msra.mxu0 %v1225
        %1249 = vmatprep.subr.bf16.mxu0 0
        %1250 = vmatpush2.bf16.msra.mxu0 0
        %1251 = vmatprep.subr.bf16.mxu0 0
        %1252 = vmatpush2.bf16.msra.mxu0 0
        %1253 = vmatprep.subr.bf16.mxu0 0
        %1254 = vmatpush2.bf16.msra.mxu0 0
        %1255 = vmatprep.subr.bf16.mxu0 0
        %1256 = vmatpush2.bf16.msra.mxu0 0
        %1257 = vmatprep.subr.bf16.mxu0 0
        %1258 = vmatpush2.bf16.msra.mxu0 0
        %1259 = vmatprep.subr.bf16.mxu0 0
        %1260 = vmatpush2.bf16.msra.mxu0 0
        %1261 = vmatprep.subr.bf16.mxu0 0
        %1262 = vmatpush2.bf16.msra.mxu0 0
        %1263 = vmatprep.subr.bf16.mxu0 0
        %1264 = vmatpush2.bf16.msra.mxu0 0
        %1265 = vmatprep.mubr.bf16.mxu0 0
        %1266 = vmatmul.mubr.bf16.gmra.mxu0 %v1222
        %v1267 = vpop.f32.mrf.mxu0
        %v1268 = vadd.f32 0.0, %v1267
        %v1269 = vpop.f32.mrf.mxu0
        %v1270 = vadd.f32 0.0, %v1269
        %v1271 = vpop.f32.mrf.mxu0
        %v1272 = vpop.f32.mrf.mxu0
        %1273 = vdwg.mxu0
        %1274 = vmatprep.subr.bf16.mxu0 0
        %1275 = vmatpush1.bf16.msra.mxu0 0
        %1276 = vmatprep.subr.bf16.mxu0 0
        %1277 = vmatpush1.bf16.msra.mxu0 0
        %1278 = vmatprep.subr.bf16.mxu0 0
        %1279 = vmatpush1.bf16.msra.mxu0 0
        %1280 = vmatprep.subr.bf16.mxu0 0
        %1281 = vmatpush1.bf16.msra.mxu0 0
        %1282 = vmatprep.subr.bf16.mxu0 0
        %1283 = vmatpush1.bf16.msra.mxu0 0
        %1284 = vmatprep.subr.bf16.mxu0 0
        %1285 = vmatpush1.bf16.msra.mxu0 0
        %1286 = vmatprep.subr.bf16.mxu0 0
        %1287 = vmatpush1.bf16.msra.mxu0 0
        %1288 = vmatprep.subr.bf16.mxu0 0
        %1289 = vmatpush1.bf16.msra.mxu0 %v1231
        %1290 = vmatprep.subr.bf16.mxu0 0
        %1291 = vmatpush2.bf16.msra.mxu0 0
        %1292 = vmatprep.subr.bf16.mxu0 0
        %1293 = vmatpush2.bf16.msra.mxu0 0
        %1294 = vmatprep.subr.bf16.mxu0 0
        %1295 = vmatpush2.bf16.msra.mxu0 0
        %1296 = vmatprep.subr.bf16.mxu0 0
        %1297 = vmatpush2.bf16.msra.mxu0 0
        %1298 = vmatprep.subr.bf16.mxu0 0
        %1299 = vmatpush2.bf16.msra.mxu0 0
        %1300 = vmatprep.subr.bf16.mxu0 0
        %1301 = vmatpush2.bf16.msra.mxu0 0
        %1302 = vmatprep.subr.bf16.mxu0 0
        %1303 = vmatpush2.bf16.msra.mxu0 0
        %1304 = vmatprep.subr.bf16.mxu0 0
        %1305 = vmatpush2.bf16.msra.mxu0 0
        %1306 = vmatprep.mubr.bf16.mxu0 0
        %1307 = vmatmul.mubr.bf16.gmra.mxu0 %v1222
        %v1308 = vpop.f32.mrf.mxu0
        %v1309 = vadd.f32 0.0, %v1308
        %v1310 = vpop.f32.mrf.mxu0
        %v1311 = vpop.f32.mrf.mxu0
        %v1312 = vpop.f32.mrf.mxu0
        %1313 = vdwg.mxu0
        %v1314 = vadd.f32 %v1185, %v1268
        %v1315 = vadd.f32 %v1186, %v1270
        %v1316 = vadd.f32 %v1187, %v1309
        %1317 = vst [vmem:[%s163] sm:$0xff] %v1314
        %1318 = vst [vmem:[%s163 + $0x8] sm:$0xff] %v1315
        %1319 = vst [vmem:[%s163 + $0x10] sm:$0xff] %v1316
        %s1320 = sand.u32 %s90, 1
        %s1321 = scalar_lea.sflag [#allocation3], %s1320
        %s1322 = sand.u32 %s90, 1
        %s1323 = smul.addr %s1322, 24
        %s1324 = scalar_lea.vmem [#allocation2], %s1323
        // Predicated region
        $region29: #{tpu_custom_call.1} parent=27 // pred_check
          %p1325 = pneg %p100
        $region30: #{tpu_custom_call.1} parent=27 // pred_check_branch
          %1327 = sbr.rel (%p1325) target = $region32
        $region31: #{tpu_custom_call.1} parent=27 // pred_region
          %s1329 = ssub.s32 384, 384
          %1330 = vsyncadd %s1321, %s1329
          %s1331 = smul.addr %s21, 3
          %s1332 = smul.addr %s20, 3
          %s1333 = sadd.s32 %s1331, %s1332
          %s1334 = smul.addr %s1333, 128
          %s1335 = scalar_lea.hbm %s2, %s1334
          %s1337 = sshll.u32 %s1324, 4
          %s1338 = int_to_ptr.vmem [resolvable:$true] %s1337
          %1340 = dma.vmem_to_hbm [thread:$0]  %s1338, 384, %s1335, %s1321
        $region32: #{tpu_custom_call.1} parent=27 // pred_fallthru
          _
      $region28: #{tpu_custom_call.1} parent=5 // pred_fallthru
        _
      %p1341 = scmp.le.s32.totalorder 2, %s11
      // Predicated region
      $region33: #{tpu_custom_call.1} parent=5 // pred_check
        %p1342 = pneg %p1341
      $region34: #{tpu_custom_call.1} parent=5 // pred_check_branch
        %1344 = sbr.rel (%p1342) target = $region36
      $region35: #{tpu_custom_call.1} parent=5 // pred_region
        %s1345 = ssub.s32 %s11, 2
        // Predicated region
        $region37: #{tpu_custom_call.1} parent=35 // pred_check
          %p1346 = pneg %p106
        $region38: #{tpu_custom_call.1} parent=35 // pred_check_branch
          %1348 = sbr.rel (%p1346) target = $region40
        $region39: #{tpu_custom_call.1} parent=35 // pred_region
          %s1349 = sand.u32 %s91, 1
          %s1350 = scalar_lea.sflag [#allocation3], %s1349
          %s1351 = sand.u32 %s91, 1
          %s1352 = smul.addr %s1351, 24
          %s1353 = scalar_lea.vmem [#allocation2], %s1352
          %1354 = dma.done %s1350, 384
        $region40: #{tpu_custom_call.1} parent=35 // pred_fallthru
          _
      $region36: #{tpu_custom_call.1} parent=5 // pred_fallthru
        _
    $region6: #{tpu_custom_call.1} parent=1 // loop_footer
      %s15 = sadd.s32 1, %s11
    $region7: #{tpu_custom_call.1} parent=1 // loop_footer_branch
      %10 = sbr.rel target = $region3
    $region8: #{tpu_custom_call.1} parent=1 // loop_exit
      _
    %1355 = vsyncpa [#allocation3], 1
    %s1356 = scalar_lea.sflag [#allocation3], 1
    %1357 = vsyncpa %s1356, 1

</llo_original>
